<compile_context>
chip_gen: v7x
topology: tpu7x:2x2x1
jax: 0.10.0
libtpu: 0.0.40
codegen_flags: <defaults>
</compile_context>

<pallas_src>
import functools

import jax
import jax.numpy as jnp
from jax.experimental import pallas as pl
from jax.experimental.pallas import tpu as pltpu

HIDDEN = 256
MAX_ACTION = 1.0
LOG_STD_MAX = 2.0
LOG_STD_MIN = -20.0
_HALF_LOG_2PI = 0.5 * float(jnp.log(2.0 * jnp.pi))

LANE = 128
SUBLANE = 8
MAX_BATCH_TILE = 512  # rows per grid step; sized for v7x's 64 MiB VMEM


def _round_up(x, m):
    return (x + m - 1) // m * m


def actor_kernel(state_ref, w1_ref, b1_ref, w2_ref, b2_ref, wh_ref, bh_ref,
                 eps_ref, mu_ref, pi_ref, logpi_ref,
                 *, action_dim, a_pad, max_action, log_std_max, log_std_min):
    # l1 + ReLU   (bf16 matmul operands, f32 accumulate, f32 elementwise)
    x = state_ref[...].astype(jnp.bfloat16)
    h1 = jnp.dot(x, w1_ref[...], preferred_element_type=jnp.float32) + b1_ref[...]
    h1 = jnp.maximum(h1, 0.0)

    # l2 + ReLU
    h2 = jnp.dot(h1.astype(jnp.bfloat16), w2_ref[...],
                 preferred_element_type=jnp.float32) + b2_ref[...]
    h2 = jnp.maximum(h2, 0.0)

    # fused mu | log_std head: single (HIDDEN, 2*A_pad) matmul, then split.
    heads = jnp.dot(h2.astype(jnp.bfloat16), wh_ref[...],
                    preferred_element_type=jnp.float32) + bh_ref[...]
    mu = heads[:, :a_pad]
    log_std = jnp.tanh(heads[:, a_pad:])
    log_std = log_std_min + 0.5 * (log_std_max - log_std_min) * (log_std + 1.0)
    std = jnp.exp(log_std)

    # Reparameterized sample: pi = mu + std * eps   (Normal.rsample)
    eps = eps_ref[...]
    pi = mu + std * eps

    # mask for the zero-padded action lanes (only first `action_dim` are real)
    lane_idx = jax.lax.broadcasted_iota(jnp.int32, (mu.shape[0], a_pad), 1)
    valid = (lane_idx < action_dim).astype(jnp.float32)

    # Normal(mu, std).log_prob(pi), with (pi - mu)/std == eps exactly.
    elem_logp = -0.5 * (eps * eps) - log_std - _HALF_LOG_2PI

    # apply_squashing_func
    mu_t = jnp.tanh(mu)
    pi_t = jnp.tanh(pi)
    # clip_but_pass_gradient(1 - pi^2, 0, 1) forward value == clip(1 - pi^2, 0, 1)
    correction = jnp.log(jnp.clip(1.0 - pi_t * pi_t, 0.0, 1.0) + 1e-6)

    log_pi = jnp.sum((elem_logp - correction) * valid, axis=-1, keepdims=True)

    mu_ref[...] = mu_t * max_action
    pi_ref[...] = pi_t * max_action
    logpi_ref[...] = log_pi


def pack_params(params):
    """Pad heads to 128 lanes, fuse mu|log_std, cast matmul weights to bf16."""
    action_dim = params["wmu"].shape[1]
    a_pad = _round_up(action_dim, LANE)

    def pad_head(w, b):
        wp = jnp.zeros((HIDDEN, a_pad), jnp.float32).at[:, :action_dim].set(w)
        bp = jnp.zeros((1, a_pad), jnp.float32).at[:, :action_dim].set(b)
        return wp, bp

    wmu, bmu = pad_head(params["wmu"], params["bmu"])
    wls, bls = pad_head(params["wls"], params["bls"])
    packed = dict(
        w1=params["w1"].astype(jnp.bfloat16), b1=params["b1"],
        w2=params["w2"].astype(jnp.bfloat16), b2=params["b2"],
        wh=jnp.concatenate([wmu, wls], axis=1).astype(jnp.bfloat16),
        bh=jnp.concatenate([bmu, bls], axis=1),
    )
    return packed, action_dim, a_pad


def actor_forward(state, params, eps, *, max_action=MAX_ACTION,
                  log_std_max=LOG_STD_MAX, log_std_min=LOG_STD_MIN):
    B, S = state.shape
    packed, A, a_pad = pack_params(params)

    # batch tiling: sublane-aligned tile, capped for VMEM / pipelined over grid
    tb = min(MAX_BATCH_TILE, _round_up(B, SUBLANE))
    b_pad = _round_up(B, tb)
    grid = (b_pad // tb,)

    state_p = jnp.zeros((b_pad, S), jnp.float32).at[:B].set(
        state.astype(jnp.float32))
    eps_p = jnp.zeros((b_pad, a_pad), jnp.float32).at[:B, :A].set(
        eps.astype(jnp.float32))

    kernel = functools.partial(
        actor_kernel, action_dim=A, a_pad=a_pad,
        max_action=float(max_action),
        log_std_max=float(log_std_max), log_std_min=float(log_std_min))

    def batch_spec(last):
        return pl.BlockSpec((tb, last), lambda i: (i, 0))

    def resident_spec(shape):
        return pl.BlockSpec(shape, lambda i: (0, 0))

    flops = 2 * b_pad * (S * HIDDEN + HIDDEN * HIDDEN + HIDDEN * 2 * a_pad)
    transcendentals = 5 * b_pad * a_pad
    bytes_accessed = (
        state_p.size * 4 + eps_p.size * 4
        + (packed["w1"].size + packed["w2"].size + packed["wh"].size) * 2
        + (packed["b1"].size + packed["b2"].size + packed["bh"].size) * 4
        + 2 * b_pad * a_pad * 4 + b_pad * 4)

    mu, pi, log_pi = pl.pallas_call(
        kernel,
        grid=grid,
        out_shape=(
            jax.ShapeDtypeStruct((b_pad, a_pad), jnp.float32),
            jax.ShapeDtypeStruct((b_pad, a_pad), jnp.float32),
            jax.ShapeDtypeStruct((b_pad, 1), jnp.float32),
        ),
        in_specs=[
            batch_spec(S),                       # state
            resident_spec((S, HIDDEN)),          # w1 (bf16)
            resident_spec((1, HIDDEN)),          # b1
            resident_spec((HIDDEN, HIDDEN)),     # w2 (bf16)
            resident_spec((1, HIDDEN)),          # b2
            resident_spec((HIDDEN, 2 * a_pad)),  # fused heads weight (bf16)
            resident_spec((1, 2 * a_pad)),       # fused heads bias
            batch_spec(a_pad),                   # eps
        ],
        out_specs=(batch_spec(a_pad), batch_spec(a_pad), batch_spec(1)),
        compiler_params=pltpu.CompilerParams(
            dimension_semantics=("parallel",),
            vmem_limit_bytes=32 * 1024 * 1024),
        cost_estimate=pl.CostEstimate(
            flops=int(flops), transcendentals=int(transcendentals),
            bytes_accessed=int(bytes_accessed)),
    )(state_p, packed["w1"], packed["b1"], packed["w2"], packed["b2"],
      packed["wh"], packed["bh"], eps_p)

    return mu[:B, :A], pi[:B, :A], log_pi[:B, 0]


def init_params(key, state_dim, action_dim):
    """Deterministic PyTorch-style uniform(-1/sqrt(fan_in), 1/sqrt(fan_in)) init."""
    def linear(k, fan_in, fan_out):
        kw, kb = jax.random.split(k)
        bound = 1.0 / jnp.sqrt(fan_in)
        w = jax.random.uniform(kw, (fan_in, fan_out), jnp.float32, -bound, bound)
        b = jax.random.uniform(kb, (1, fan_out), jnp.float32, -bound, bound)
        return w, b

    k1, k2, k3, k4 = jax.random.split(key, 4)
    w1, b1 = linear(k1, state_dim, HIDDEN)
    w2, b2 = linear(k2, HIDDEN, HIDDEN)
    wmu, bmu = linear(k3, HIDDEN, action_dim)
    wls, bls = linear(k4, HIDDEN, action_dim)
    return dict(w1=w1, b1=b1, w2=w2, b2=b2, wmu=wmu, bmu=bmu, wls=wls, bls=bls)


def actor_forward_ref(state, params, eps, *, max_action=MAX_ACTION,
                      log_std_max=LOG_STD_MAX, log_std_min=LOG_STD_MIN):
    """Pure-JAX reference mirroring the PyTorch forward, using the same
    bf16-operand / f32-accumulate matmul precision as the kernel."""
    def mm(x, w):
        return jnp.dot(x.astype(jnp.bfloat16), w.astype(jnp.bfloat16),
                       preferred_element_type=jnp.float32)

    h1 = jax.nn.relu(mm(state, params["w1"]) + params["b1"])
    h2 = jax.nn.relu(mm(h1, params["w2"]) + params["b2"])
    mu = mm(h2, params["wmu"]) + params["bmu"]
    log_std = jnp.tanh(mm(h2, params["wls"]) + params["bls"])
    log_std = log_std_min + 0.5 * (log_std_max - log_std_min) * (log_std + 1.0)
    std = jnp.exp(log_std)
    pi = mu + std * eps
    log_pi = jnp.sum(-0.5 * eps ** 2 - log_std - _HALF_LOG_2PI, axis=-1)
    mu_t, pi_t = jnp.tanh(mu), jnp.tanh(pi)
    log_pi = log_pi - jnp.sum(
        jnp.log(jnp.clip(1.0 - pi_t ** 2, 0.0, 1.0) + 1e-6), axis=-1)
    return mu_t * max_action, pi_t * max_action, log_pi


if __name__ == "__main__":
    key = jax.random.PRNGKey(0)
    k_param, k_state, k_eps = jax.random.split(key, 3)

    batch, state_dim, action_dim = 4, 16, 4
    params = init_params(k_param, state_dim, action_dim)
    state = jax.random.normal(k_state, (batch, state_dim), jnp.float32)
    eps = jax.random.normal(k_eps, (batch, action_dim), jnp.float32)

    mu, pi, log_pi = actor_forward(state, params, eps)
    jax.block_until_ready((mu, pi, log_pi))

    mu_r, pi_r, log_pi_r = actor_forward_ref(state, params, eps)
    assert mu.shape == (batch, action_dim)
    assert pi.shape == (batch, action_dim)
    assert log_pi.shape == (batch,)
    assert jnp.allclose(mu, mu_r, atol=2e-3), "mu mismatch"
    assert jnp.allclose(pi, pi_r, atol=2e-3), "pi mismatch"
    assert jnp.allclose(log_pi, log_pi_r, atol=1e-2), "log_pi mismatch"

    print("KERNEL_OK")
</pallas_src>

<mosaic_0001>
module attributes {stable_mosaic.version = 11 : i64} {
  func.func @actor_kernel(%arg0: i32, %arg1: memref<8x16xf32, #tpu.memory_space<vmem>>, %arg2: memref<16x256xbf16, #tpu.memory_space<vmem>>, %arg3: memref<1x256xf32, #tpu.memory_space<vmem>>, %arg4: memref<256x256xbf16, #tpu.memory_space<vmem>>, %arg5: memref<1x256xf32, #tpu.memory_space<vmem>>, %arg6: memref<256x256xbf16, #tpu.memory_space<vmem>>, %arg7: memref<1x256xf32, #tpu.memory_space<vmem>>, %arg8: memref<8x128xf32, #tpu.memory_space<vmem>>, %arg9: memref<8x128xf32, #tpu.memory_space<vmem>>, %arg10: memref<8x128xf32, #tpu.memory_space<vmem>>, %arg11: memref<8x1xf32, #tpu.memory_space<vmem>>) attributes {dimension_semantics = [#tpu.dimension_semantics<parallel>], iteration_bounds = array<i64: 1>, scalar_prefetch = 0 : i64, scratch_operands = 0 : i64, tpu.core_type = #tpu.core_type<tc>, window_params = [{transform_indices = @transform_0, window_bounds = array<i64: 8, 16>}, {pipeline_mode = #tpu.pipeline_mode<synchronous>, transform_indices = @transform_1, window_bounds = array<i64: 16, 256>}, {pipeline_mode = #tpu.pipeline_mode<synchronous>, transform_indices = @transform_2, window_bounds = array<i64: 1, 256>}, {pipeline_mode = #tpu.pipeline_mode<synchronous>, transform_indices = @transform_3, window_bounds = array<i64: 256, 256>}, {pipeline_mode = #tpu.pipeline_mode<synchronous>, transform_indices = @transform_4, window_bounds = array<i64: 1, 256>}, {pipeline_mode = #tpu.pipeline_mode<synchronous>, transform_indices = @transform_5, window_bounds = array<i64: 256, 256>}, {pipeline_mode = #tpu.pipeline_mode<synchronous>, transform_indices = @transform_6, window_bounds = array<i64: 1, 256>}, {transform_indices = @transform_7, window_bounds = array<i64: 8, 128>}, {transform_indices = @transform_8, window_bounds = array<i64: 8, 128>}, {transform_indices = @transform_9, window_bounds = array<i64: 8, 128>}, {transform_indices = @transform_10, window_bounds = array<i64: 8, 1>}]} {
    %c0 = arith.constant 0 : index
    %c0_0 = arith.constant 0 : index
    %0 = vector.load %arg1[%c0, %c0_0] : memref<8x16xf32, #tpu.memory_space<vmem>>, vector<8x16xf32>
    %1 = arith.truncf %0 : vector<8x16xf32> to vector<8x16xbf16>
    %c0_1 = arith.constant 0 : index
    %c0_2 = arith.constant 0 : index
    %2 = vector.load %arg2[%c0_1, %c0_2] : memref<16x256xbf16, #tpu.memory_space<vmem>>, vector<16x256xbf16>
    %cst = arith.constant dense<0.000000e+00> : vector<8x256xf32>
    %3 = tpu.matmul %1, %2, %cst {dimension_numbers = #tpu.dot_dimension_numbers<[1], [0], [0], [1], [0, 0, 1, 1], [], []>} : vector<8x16xbf16>, vector<16x256xbf16>, vector<8x256xf32> -> vector<8x256xf32>
    %c0_3 = arith.constant 0 : index
    %c0_4 = arith.constant 0 : index
    %4 = vector.load %arg3[%c0_3, %c0_4] : memref<1x256xf32, #tpu.memory_space<vmem>>, vector<1x256xf32>
    %5 = vector.broadcast %4 : vector<1x256xf32> to vector<8x256xf32>
    %6 = arith.addf %3, %5 : vector<8x256xf32>
    %cst_5 = arith.constant 0.000000e+00 : f32
    %7 = vector.broadcast %cst_5 : f32 to vector<8x256xf32>
    %8 = arith.maximumf %6, %7 : vector<8x256xf32>
    %9 = arith.truncf %8 : vector<8x256xf32> to vector<8x256xbf16>
    %c0_6 = arith.constant 0 : index
    %c0_7 = arith.constant 0 : index
    %10 = vector.load %arg4[%c0_6, %c0_7] : memref<256x256xbf16, #tpu.memory_space<vmem>>, vector<256x256xbf16>
    %cst_8 = arith.constant dense<0.000000e+00> : vector<8x256xf32>
    %11 = tpu.matmul %9, %10, %cst_8 {dimension_numbers = #tpu.dot_dimension_numbers<[1], [0], [0], [1], [0, 0, 1, 1], [], []>} : vector<8x256xbf16>, vector<256x256xbf16>, vector<8x256xf32> -> vector<8x256xf32>
    %c0_9 = arith.constant 0 : index
    %c0_10 = arith.constant 0 : index
    %12 = vector.load %arg5[%c0_9, %c0_10] : memref<1x256xf32, #tpu.memory_space<vmem>>, vector<1x256xf32>
    %13 = vector.broadcast %12 : vector<1x256xf32> to vector<8x256xf32>
    %14 = arith.addf %11, %13 : vector<8x256xf32>
    %cst_11 = arith.constant 0.000000e+00 : f32
    %15 = vector.broadcast %cst_11 : f32 to vector<8x256xf32>
    %16 = arith.maximumf %14, %15 : vector<8x256xf32>
    %17 = arith.truncf %16 : vector<8x256xf32> to vector<8x256xbf16>
    %c0_12 = arith.constant 0 : index
    %c0_13 = arith.constant 0 : index
    %18 = vector.load %arg6[%c0_12, %c0_13] : memref<256x256xbf16, #tpu.memory_space<vmem>>, vector<256x256xbf16>
    %cst_14 = arith.constant dense<0.000000e+00> : vector<8x256xf32>
    %19 = tpu.matmul %17, %18, %cst_14 {dimension_numbers = #tpu.dot_dimension_numbers<[1], [0], [0], [1], [0, 0, 1, 1], [], []>} : vector<8x256xbf16>, vector<256x256xbf16>, vector<8x256xf32> -> vector<8x256xf32>
    %c0_15 = arith.constant 0 : index
    %c0_16 = arith.constant 0 : index
    %20 = vector.load %arg7[%c0_15, %c0_16] : memref<1x256xf32, #tpu.memory_space<vmem>>, vector<1x256xf32>
    %21 = vector.broadcast %20 : vector<1x256xf32> to vector<8x256xf32>
    %22 = arith.addf %19, %21 : vector<8x256xf32>
    %23 = vector.extract_strided_slice %22 {offsets = [0, 0], sizes = [8, 128], strides = [1, 1]} : vector<8x256xf32> to vector<8x128xf32>
    %24 = vector.extract_strided_slice %22 {offsets = [0, 128], sizes = [8, 128], strides = [1, 1]} : vector<8x256xf32> to vector<8x128xf32>
    %25 = math.tanh %24 : vector<8x128xf32>
    %cst_17 = arith.constant 1.000000e+00 : f32
    %26 = vector.broadcast %cst_17 : f32 to vector<8x128xf32>
    %27 = arith.addf %25, %26 : vector<8x128xf32>
    %cst_18 = arith.constant 1.100000e+01 : f32
    %28 = vector.broadcast %cst_18 : f32 to vector<8x128xf32>
    %29 = arith.mulf %28, %27 : vector<8x128xf32>
    %cst_19 = arith.constant -2.000000e+01 : f32
    %30 = vector.broadcast %cst_19 : f32 to vector<8x128xf32>
    %31 = arith.addf %30, %29 : vector<8x128xf32>
    %32 = math.exp %31 : vector<8x128xf32>
    %c0_20 = arith.constant 0 : index
    %c0_21 = arith.constant 0 : index
    %33 = vector.load %arg8[%c0_20, %c0_21] : memref<8x128xf32, #tpu.memory_space<vmem>>, vector<8x128xf32>
    %34 = arith.mulf %32, %33 : vector<8x128xf32>
    %35 = arith.addf %23, %34 : vector<8x128xf32>
    %36 = tpu.iota {dimensions = array<i32: 1>} : vector<8x128xi32>
    %c4_i32 = arith.constant 4 : i32
    %37 = vector.broadcast %c4_i32 : i32 to vector<8x128xi32>
    %38 = arith.cmpi slt, %36, %37 : vector<8x128xi32>
    %39 = arith.extui %38 : vector<8x128xi1> to vector<8x128xi32>
    %40 = arith.sitofp %39 : vector<8x128xi32> to vector<8x128xf32>
    %41 = arith.mulf %33, %33 : vector<8x128xf32>
    %cst_22 = arith.constant -5.000000e-01 : f32
    %42 = vector.broadcast %cst_22 : f32 to vector<8x128xf32>
    %43 = arith.mulf %42, %41 : vector<8x128xf32>
    %44 = arith.subf %43, %31 : vector<8x128xf32>
    %cst_23 = arith.constant 0.918938517 : f32
    %45 = vector.broadcast %cst_23 : f32 to vector<8x128xf32>
    %46 = arith.subf %44, %45 : vector<8x128xf32>
    %47 = math.tanh %23 : vector<8x128xf32>
    %48 = math.tanh %35 : vector<8x128xf32>
    %49 = arith.mulf %48, %48 : vector<8x128xf32>
    %cst_24 = arith.constant 1.000000e+00 : f32
    %50 = vector.broadcast %cst_24 : f32 to vector<8x128xf32>
    %51 = arith.subf %50, %49 : vector<8x128xf32>
    %cst_25 = arith.constant 0.000000e+00 : f32
    %cst_26 = arith.constant 1.000000e+00 : f32
    %52 = vector.broadcast %cst_25 : f32 to vector<8x128xf32>
    %53 = arith.maximumf %52, %51 : vector<8x128xf32>
    %54 = vector.broadcast %cst_26 : f32 to vector<8x128xf32>
    %55 = arith.minimumf %54, %53 : vector<8x128xf32>
    %cst_27 = arith.constant 9.99999997E-7 : f32
    %56 = vector.broadcast %cst_27 : f32 to vector<8x128xf32>
    %57 = arith.addf %55, %56 : vector<8x128xf32>
    %58 = math.log %57 : vector<8x128xf32>
    %59 = arith.subf %46, %58 : vector<8x128xf32>
    %60 = arith.mulf %59, %40 : vector<8x128xf32>
    %cst_28 = arith.constant dense<0.000000e+00> : vector<8xf32>
    %61 = vector.multi_reduction <add>, %60, %cst_28 [1] : vector<8x128xf32> to vector<8xf32>
    %62 = vector.shape_cast %61 : vector<8xf32> to vector<8x1xf32>
    %cst_29 = arith.constant 1.000000e+00 : f32
    %63 = vector.broadcast %cst_29 : f32 to vector<8x128xf32>
    %64 = arith.mulf %47, %63 : vector<8x128xf32>
    %c0_30 = arith.constant 0 : index
    %c0_31 = arith.constant 0 : index
    %65 = vector.load %arg9[%c0_30, %c0_31] : memref<8x128xf32, #tpu.memory_space<vmem>>, vector<8x128xf32>
    tpu.vector_store %arg9[%c0_30, %c0_31], %64 {strides = array<i32>} : memref<8x128xf32, #tpu.memory_space<vmem>>, vector<8x128xf32>,
    %cst_32 = arith.constant 1.000000e+00 : f32
    %66 = vector.broadcast %cst_32 : f32 to vector<8x128xf32>
    %67 = arith.mulf %48, %66 : vector<8x128xf32>
    %c0_33 = arith.constant 0 : index
    %c0_34 = arith.constant 0 : index
    %68 = vector.load %arg10[%c0_33, %c0_34] : memref<8x128xf32, #tpu.memory_space<vmem>>, vector<8x128xf32>
    tpu.vector_store %arg10[%c0_33, %c0_34], %67 {strides = array<i32>} : memref<8x128xf32, #tpu.memory_space<vmem>>, vector<8x128xf32>,
    %c0_35 = arith.constant 0 : index
    %c0_36 = arith.constant 0 : index
    %69 = vector.load %arg11[%c0_35, %c0_36] : memref<8x1xf32, #tpu.memory_space<vmem>>, vector<8x1xf32>
    tpu.vector_store %arg11[%c0_35, %c0_36], %62 {strides = array<i32>} : memref<8x1xf32, #tpu.memory_space<vmem>>, vector<8x1xf32>,
    return
  }
  func.func @transform_0(%arg0: i32) -> (i32, i32) {
    %c0_i32 = arith.constant 0 : i32
    %c0_i32_0 = arith.constant 0 : i32
    return %arg0, %c0_i32 : i32, i32
  }
  func.func @transform_1(%arg0: i32) -> (i32, i32) {
    %c0_i32 = arith.constant 0 : i32
    %c0_i32_0 = arith.constant 0 : i32
    %c0_i32_1 = arith.constant 0 : i32
    return %c0_i32, %c0_i32_0 : i32, i32
  }
  func.func @transform_2(%arg0: i32) -> (i32, i32) {
    %c0_i32 = arith.constant 0 : i32
    %c0_i32_0 = arith.constant 0 : i32
    %c0_i32_1 = arith.constant 0 : i32
    return %c0_i32, %c0_i32_0 : i32, i32
  }
  func.func @transform_3(%arg0: i32) -> (i32, i32) {
    %c0_i32 = arith.constant 0 : i32
    %c0_i32_0 = arith.constant 0 : i32
    %c0_i32_1 = arith.constant 0 : i32
    return %c0_i32, %c0_i32_0 : i32, i32
  }
  func.func @transform_4(%arg0: i32) -> (i32, i32) {
    %c0_i32 = arith.constant 0 : i32
    %c0_i32_0 = arith.constant 0 : i32
    %c0_i32_1 = arith.constant 0 : i32
    return %c0_i32, %c0_i32_0 : i32, i32
  }
  func.func @transform_5(%arg0: i32) -> (i32, i32) {
    %c0_i32 = arith.constant 0 : i32
    %c0_i32_0 = arith.constant 0 : i32
    %c0_i32_1 = arith.constant 0 : i32
    return %c0_i32, %c0_i32_0 : i32, i32
  }
  func.func @transform_6(%arg0: i32) -> (i32, i32) {
    %c0_i32 = arith.constant 0 : i32
    %c0_i32_0 = arith.constant 0 : i32
    %c0_i32_1 = arith.constant 0 : i32
    return %c0_i32, %c0_i32_0 : i32, i32
  }
  func.func @transform_7(%arg0: i32) -> (i32, i32) {
    %c0_i32 = arith.constant 0 : i32
    %c0_i32_0 = arith.constant 0 : i32
    return %arg0, %c0_i32 : i32, i32
  }
  func.func @transform_8(%arg0: i32) -> (i32, i32) {
    %c0_i32 = arith.constant 0 : i32
    %c0_i32_0 = arith.constant 0 : i32
    return %arg0, %c0_i32 : i32, i32
  }
  func.func @transform_9(%arg0: i32) -> (i32, i32) {
    %c0_i32 = arith.constant 0 : i32
    %c0_i32_0 = arith.constant 0 : i32
    return %arg0, %c0_i32 : i32, i32
  }
  func.func @transform_10(%arg0: i32) -> (i32, i32) {
    %c0_i32 = arith.constant 0 : i32
    %c0_i32_0 = arith.constant 0 : i32
    return %arg0, %c0_i32 : i32, i32
  }
}

</mosaic_0001>

<llo_original>
// kernel: tpu_custom_call.1
$region0: #{tpu_custom_call.1}
  #allocation0 [shape = 'u32[]', space=smem, size = 0x4, offset = 0x4, fixed_abs, tag = 'smem constant byte address 0x4 - core index']
  #allocation1 [shape = 'u32[144,128]{1,0:T(1,128)}', space=vmem, size = 0x12000, scoped, tag = 'internal scratch']
  %s0 = inlined_call_operand.hbm [shape: f32[8,16], index: 0, kind: input, shape index: {}]
  %s1 = inlined_call_operand.hbm [shape: bf16[16,256], index: 1, kind: input, shape index: {}]
  %s2 = inlined_call_operand.vmem [shape: f32[1,256], index: 2, kind: input, shape index: {}]
  %s3 = inlined_call_operand.hbm [shape: bf16[256,256], index: 3, kind: input, shape index: {}]
  %s4 = inlined_call_operand.vmem [shape: f32[1,256], index: 4, kind: input, shape index: {}]
  %s5 = inlined_call_operand.hbm [shape: bf16[256,256], index: 5, kind: input, shape index: {}]
  %s6 = inlined_call_operand.vmem [shape: f32[1,256], index: 6, kind: input, shape index: {}]
  %s7 = inlined_call_operand.vmem [shape: f32[8,128], index: 7, kind: input, shape index: {}]
  %s8 = inlined_call_operand.hbm [shape: f32[8,128], index: 8, kind: output, shape index: {0}]
  %s9 = inlined_call_operand.hbm [shape: f32[8,128], index: 9, kind: output, shape index: {1}]
  %s10 = inlined_call_operand.vmem [shape: f32[8,1], index: 10, kind: output, shape index: {2}]
  %11 = xla_tuple %s8, %s9, %s10
  %s12 = sld [smem:[#allocation0]]
  $region74: #{tpu_custom_call.1} parent=0
    _
  %s14 = ssub.s32 1, %s12
  %s15 = scalar_select 0, %s14, %s12
  $region1: #{tpu_custom_call.1} parent=0
    #allocation2 [shape = 'u8[4096]{0}', space=vmem, size = 0x1000, scoped, tag = 'input window, operand 0, single buffered']
    #allocation3 [shape = 's32[1]{0}', space=sflag, size = 0x4, scoped, tag = 'scoped memory for tpu_custom_call.1']
    #allocation4 [shape = 's32[1]{0}', space=sflag, size = 0x4, scoped, tag = 'scoped memory for tpu_custom_call.1']
    #allocation5 [shape = 'u8[8192]{0}', space=vmem, size = 0x2000, scoped, tag = 'input window, operand 1, single buffered']
    #allocation6 [shape = 's32[1]{0}', space=sflag, size = 0x4, scoped, tag = 'scoped memory for tpu_custom_call.1']
    #allocation7 [shape = 'u8[131072]{0}', space=vmem, size = 0x20000, scoped, tag = 'input window, operand 3, single buffered']
    #allocation8 [shape = 'u8[131072]{0}', space=vmem, size = 0x20000, scoped, tag = 'input window, operand 5, single buffered']
    #allocation9 [shape = 's32[1]{0}', space=sflag, size = 0x4, scoped, tag = 'scoped memory for tpu_custom_call.1']
    #allocation10 [shape = 'u8[4096]{0}', space=vmem, size = 0x1000, scoped, tag = 'output window, operand 0, single buffered']
    #allocation11 [shape = 'u8[4096]{0}', space=vmem, size = 0x1000, scoped, tag = 'output window, operand 1, single buffered']
    #allocation12 [shape = 's32[1]{0}', space=sflag, size = 0x4, scoped, tag = 'scoped memory for tpu_custom_call.1']
    %16 = vsyncpa [#allocation3], 0
    %17 = vsyncpa [#allocation6], 0
    %18 = vsyncpa [#allocation9], 0
    %19 = vsyncpa [#allocation4], 0
    %20 = vsyncpa [#allocation12], 0
    // Predicated region
    $region2: #{tpu_custom_call.1} parent=1 // pred_check
      _
    $region3: #{tpu_custom_call.1} parent=1 // pred_check_branch
      %22 = sbr.rel (0) target = $region5
    $region4: #{tpu_custom_call.1} parent=1 // pred_region
      %s24 = ssub.s32 128, 128
      %25 = vsyncadd [#allocation3], %s24
      %s27 = sshll.u32 [#allocation2], 4
      %s28 = int_to_ptr.vmem [resolvable:$true] %s27
      %30 = dma.hbm_to_vmem [thread:$0]  %s0, 128, %s28, [#allocation3]
    $region5: #{tpu_custom_call.1} parent=1 // pred_fallthru
      _
    // Predicated region
    $region6: #{tpu_custom_call.1} parent=1 // pred_check
      _
    $region7: #{tpu_custom_call.1} parent=1 // pred_check_branch
      %32 = sbr.rel (0) target = $region9
    $region8: #{tpu_custom_call.1} parent=1 // pred_region
      %s34 = ssub.s32 256, 256
      %35 = vsyncadd [#allocation6], %s34
      %s36 = sshll.u32 [#allocation5], 4
      %s37 = int_to_ptr.vmem [resolvable:$true] %s36
      %42 = dma.hbm_to_vmem [thread:$0]  %s1, 256, %s37, [#allocation6], 128, 128, 8
    $region9: #{tpu_custom_call.1} parent=1 // pred_fallthru
      _
    // Predicated region
    $region10: #{tpu_custom_call.1} parent=1 // pred_check
      _
    $region11: #{tpu_custom_call.1} parent=1 // pred_check_branch
      %44 = sbr.rel (0) target = $region13
    $region12: #{tpu_custom_call.1} parent=1 // pred_region
      _
    $region13: #{tpu_custom_call.1} parent=1 // pred_fallthru
      _
    // Predicated region
    $region14: #{tpu_custom_call.1} parent=1 // pred_check
      _
    $region15: #{tpu_custom_call.1} parent=1 // pred_check_branch
      %46 = sbr.rel (0) target = $region17
    $region16: #{tpu_custom_call.1} parent=1 // pred_region
      %s48 = ssub.s32 4096, 4096
      %49 = vsyncadd [#allocation6], %s48
      %s50 = sshll.u32 [#allocation7], 4
      %s51 = int_to_ptr.vmem [resolvable:$true] %s50
      %56 = dma.hbm_to_vmem [thread:$0]  %s3, 4096, %s51, [#allocation6], 128, 128, 8
    $region17: #{tpu_custom_call.1} parent=1 // pred_fallthru
      _
    // Predicated region
    $region18: #{tpu_custom_call.1} parent=1 // pred_check
      _
    $region19: #{tpu_custom_call.1} parent=1 // pred_check_branch
      %58 = sbr.rel (0) target = $region21
    $region20: #{tpu_custom_call.1} parent=1 // pred_region
      _
    $region21: #{tpu_custom_call.1} parent=1 // pred_fallthru
      _
    // Predicated region
    $region22: #{tpu_custom_call.1} parent=1 // pred_check
      _
    $region23: #{tpu_custom_call.1} parent=1 // pred_check_branch
      %60 = sbr.rel (0) target = $region25
    $region24: #{tpu_custom_call.1} parent=1 // pred_region
      %s62 = ssub.s32 4096, 4096
      %63 = vsyncadd [#allocation9], %s62
      %s64 = sshll.u32 [#allocation8], 4
      %s65 = int_to_ptr.vmem [resolvable:$true] %s64
      %70 = dma.hbm_to_vmem [thread:$0]  %s5, 4096, %s65, [#allocation9], 128, 128, 8
    $region25: #{tpu_custom_call.1} parent=1 // pred_fallthru
      _
    // Predicated region
    $region26: #{tpu_custom_call.1} parent=1 // pred_check
      _
    $region27: #{tpu_custom_call.1} parent=1 // pred_check_branch
      %72 = sbr.rel (0) target = $region29
    $region28: #{tpu_custom_call.1} parent=1 // pred_region
      _
    $region29: #{tpu_custom_call.1} parent=1 // pred_fallthru
      _
    // Predicated region
    $region30: #{tpu_custom_call.1} parent=1 // pred_check
      _
    $region31: #{tpu_custom_call.1} parent=1 // pred_check_branch
      %74 = sbr.rel (0) target = $region33
    $region32: #{tpu_custom_call.1} parent=1 // pred_region
      _
    $region33: #{tpu_custom_call.1} parent=1 // pred_fallthru
      _
    // Predicated region
    $region34: #{tpu_custom_call.1} parent=1 // pred_check
      _
    $region35: #{tpu_custom_call.1} parent=1 // pred_check_branch
      %76 = sbr.rel (0) target = $region37
    $region36: #{tpu_custom_call.1} parent=1 // pred_region
      %77 = dma.done [#allocation3], 128
    $region37: #{tpu_custom_call.1} parent=1 // pred_fallthru
      _
    // Predicated region
    $region38: #{tpu_custom_call.1} parent=1 // pred_check
      _
    $region39: #{tpu_custom_call.1} parent=1 // pred_check_branch
      %79 = sbr.rel (0) target = $region41
    $region40: #{tpu_custom_call.1} parent=1 // pred_region
      %80 = dma.done [#allocation6], 256
    $region41: #{tpu_custom_call.1} parent=1 // pred_fallthru
      _
    // Predicated region
    $region42: #{tpu_custom_call.1} parent=1 // pred_check
      _
    $region43: #{tpu_custom_call.1} parent=1 // pred_check_branch
      %82 = sbr.rel (0) target = $region45
    $region44: #{tpu_custom_call.1} parent=1 // pred_region
      %83 = dma.done [#allocation6], 4096
    $region45: #{tpu_custom_call.1} parent=1 // pred_fallthru
      _
    // Predicated region
    $region46: #{tpu_custom_call.1} parent=1 // pred_check
      _
    $region47: #{tpu_custom_call.1} parent=1 // pred_check_branch
      %85 = sbr.rel (0) target = $region49
    $region48: #{tpu_custom_call.1} parent=1 // pred_region
      %86 = dma.done [#allocation9], 4096
    $region49: #{tpu_custom_call.1} parent=1 // pred_fallthru
      _
    %v88 = vld [vmem:[#allocation2] sm:$0xff]
    %v89 = vpack.c.bf16 %v88, %v88
    %v90 = vld [vmem:[#allocation5] sm:$0xff]
    %v91 = vld [vmem:[#allocation5 + $0x8] sm:$0xff]
    %v92 = vld [vmem:[%s2] sm:$0x3]
    %v94 = vlaneseq
    %v95 = vshrl.u32 %v94, 7
    %v96 = vsub.s32 0, %v95
    %v97 = vrot.slane %v92, %v96
    %v98 = vlaneseq
    %v99 = vshrl.u32 %v98, 7
    %v100 = vsub.s32 1, %v99
    %v101 = vrot.slane %v92, %v100
    %v106 = vunpack.c.l.b16 %v90
    %v107 = vunpack.c.h.b16 %v90
    %v108 = vunpack.c.l.b16 %v91
    %v109 = vunpack.c.h.b16 %v91
    %v110 = vpack.c.b16 %v108, %v106
    %v111 = vpack.c.b16 %v109, %v107
    %vm114 = vcmask 130048
    %v116 = vsel %vm114, %v89, 0
    %118 = vmatprep.subr.bf16.mxu0 %v111
    %119 = vmatpush1.bf16.msra.mxu0 %v110
    %120 = vmatprep.subr.bf16.mxu0 0
    %121 = vmatpush1.bf16.msra.mxu0 0
    %122 = vmatprep.subr.bf16.mxu0 0
    %123 = vmatpush1.bf16.msra.mxu0 0
    %124 = vmatprep.subr.bf16.mxu0 0
    %125 = vmatpush1.bf16.msra.mxu0 0
    %126 = vmatprep.subr.bf16.mxu0 0
    %127 = vmatpush1.bf16.msra.mxu0 0
    %128 = vmatprep.subr.bf16.mxu0 0
    %129 = vmatpush1.bf16.msra.mxu0 0
    %130 = vmatprep.subr.bf16.mxu0 0
    %131 = vmatpush1.bf16.msra.mxu0 0
    %132 = vmatprep.subr.bf16.mxu0 0
    %133 = vmatpush1.bf16.msra.mxu0 0
    %134 = vmatprep.subr.bf16.mxu0 0
    %135 = vmatpush1.bf16.msra.mxu0 0
    %136 = vmatprep.subr.bf16.mxu0 0
    %137 = vmatpush1.bf16.msra.mxu0 0
    %138 = vmatprep.subr.bf16.mxu0 0
    %139 = vmatpush1.bf16.msra.mxu0 0
    %140 = vmatprep.subr.bf16.mxu0 0
    %141 = vmatpush1.bf16.msra.mxu0 0
    %142 = vmatprep.subr.bf16.mxu0 0
    %143 = vmatpush1.bf16.msra.mxu0 0
    %144 = vmatprep.subr.bf16.mxu0 0
    %145 = vmatpush1.bf16.msra.mxu0 0
    %146 = vmatprep.subr.bf16.mxu0 0
    %147 = vmatpush1.bf16.msra.mxu0 0
    %148 = vmatprep.subr.bf16.mxu0 0
    %149 = vmatpush1.bf16.msra.mxu0 0
    %150 = vmatprep.mubr.bf16.mxu0 0
    %151 = vmatmul.mubr.bf16.gmra.mrb[0].mxu0 %v116
    %v152 = vpop.f32.mrb[0].mxu0
    %v153 = vadd.f32 %v97, %v152
    %v154 = vpop.f32.mrb[0].mxu0
    %v155 = vadd.f32 %v101, %v154
    %v156 = vpop.f32.mrb[0].mxu0
    %v157 = vpop.f32.mrb[0].mxu0
    %158 = vdwg.mxu0
    %v159 = vmax.f32 %v153, 0.0
    %v160 = vmax.f32 %v155, 0.0
    %v161 = vpack.c.bf16 %v159, %v159
    %v162 = vpack.c.bf16 %v160, %v160
    %v163 = vld [vmem:[#allocation7] sm:$0xff]
    %v164 = vld [vmem:[#allocation7 + $0x8] sm:$0xff]
    %v165 = vld [vmem:[#allocation7 + $0x10] sm:$0xff]
    %v166 = vld [vmem:[#allocation7 + $0x18] sm:$0xff]
    %v167 = vld [vmem:[#allocation7 + $0x20] sm:$0xff]
    %v168 = vld [vmem:[#allocation7 + $0x28] sm:$0xff]
    %v169 = vld [vmem:[#allocation7 + $0x30] sm:$0xff]
    %v170 = vld [vmem:[#allocation7 + $0x38] sm:$0xff]
    %v171 = vld [vmem:[#allocation7 + $0x40] sm:$0xff]
    %v172 = vld [vmem:[#allocation7 + $0x48] sm:$0xff]
    %v173 = vld [vmem:[#allocation7 + $0x50] sm:$0xff]
    %v174 = vld [vmem:[#allocation7 + $0x58] sm:$0xff]
    %v175 = vld [vmem:[#allocation7 + $0x60] sm:$0xff]
    %v176 = vld [vmem:[#allocation7 + $0x68] sm:$0xff]
    %v177 = vld [vmem:[#allocation7 + $0x70] sm:$0xff]
    %v178 = vld [vmem:[#allocation7 + $0x78] sm:$0xff]
    %v179 = vld [vmem:[#allocation7 + $0x80] sm:$0xff]
    %v180 = vld [vmem:[#allocation7 + $0x88] sm:$0xff]
    %v181 = vld [vmem:[#allocation7 + $0x90] sm:$0xff]
    %v182 = vld [vmem:[#allocation7 + $0x98] sm:$0xff]
    %v183 = vld [vmem:[#allocation7 + $0xa0] sm:$0xff]
    %v184 = vld [vmem:[#allocation7 + $0xa8] sm:$0xff]
    %v185 = vld [vmem:[#allocation7 + $0xb0] sm:$0xff]
    %v186 = vld [vmem:[#allocation7 + $0xb8] sm:$0xff]
    %v187 = vld [vmem:[#allocation7 + $0xc0] sm:$0xff]
    %v188 = vld [vmem:[#allocation7 + $0xc8] sm:$0xff]
    %v189 = vld [vmem:[#allocation7 + $0xd0] sm:$0xff]
    %v190 = vld [vmem:[#allocation7 + $0xd8] sm:$0xff]
    %v191 = vld [vmem:[#allocation7 + $0xe0] sm:$0xff]
    %v192 = vld [vmem:[#allocation7 + $0xe8] sm:$0xff]
    %v193 = vld [vmem:[#allocation7 + $0xf0] sm:$0xff]
    %v194 = vld [vmem:[#allocation7 + $0xf8] sm:$0xff]
    %v195 = vld [vmem:[%s4] sm:$0x3]
    %v197 = vlaneseq
    %v198 = vshrl.u32 %v197, 7
    %v199 = vsub.s32 0, %v198
    %v200 = vrot.slane %v195, %v199
    %v201 = vlaneseq
    %v202 = vshrl.u32 %v201, 7
    %v203 = vsub.s32 1, %v202
    %v204 = vrot.slane %v195, %v203
    %v239 = vunpack.c.l.b16 %v163
    %v240 = vunpack.c.h.b16 %v163
    %v241 = vunpack.c.l.b16 %v164
    %v242 = vunpack.c.h.b16 %v164
    %v243 = vunpack.c.l.b16 %v165
    %v244 = vunpack.c.h.b16 %v165
    %v245 = vunpack.c.l.b16 %v166
    %v246 = vunpack.c.h.b16 %v166
    %v247 = vunpack.c.l.b16 %v167
    %v248 = vunpack.c.h.b16 %v167
    %v249 = vunpack.c.l.b16 %v168
    %v250 = vunpack.c.h.b16 %v168
    %v251 = vunpack.c.l.b16 %v169
    %v252 = vunpack.c.h.b16 %v169
    %v253 = vunpack.c.l.b16 %v170
    %v254 = vunpack.c.h.b16 %v170
    %v255 = vunpack.c.l.b16 %v171
    %v256 = vunpack.c.h.b16 %v171
    %v257 = vunpack.c.l.b16 %v172
    %v258 = vunpack.c.h.b16 %v172
    %v259 = vunpack.c.l.b16 %v173
    %v260 = vunpack.c.h.b16 %v173
    %v261 = vunpack.c.l.b16 %v174
    %v262 = vunpack.c.h.b16 %v174
    %v263 = vunpack.c.l.b16 %v175
    %v264 = vunpack.c.h.b16 %v175
    %v265 = vunpack.c.l.b16 %v176
    %v266 = vunpack.c.h.b16 %v176
    %v267 = vunpack.c.l.b16 %v177
    %v268 = vunpack.c.h.b16 %v177
    %v269 = vunpack.c.l.b16 %v178
    %v270 = vunpack.c.h.b16 %v178
    %v271 = vunpack.c.l.b16 %v179
    %v272 = vunpack.c.h.b16 %v179
    %v273 = vunpack.c.l.b16 %v180
    %v274 = vunpack.c.h.b16 %v180
    %v275 = vunpack.c.l.b16 %v181
    %v276 = vunpack.c.h.b16 %v181
    %v277 = vunpack.c.l.b16 %v182
    %v278 = vunpack.c.h.b16 %v182
    %v279 = vunpack.c.l.b16 %v183
    %v280 = vunpack.c.h.b16 %v183
    %v281 = vunpack.c.l.b16 %v184
    %v282 = vunpack.c.h.b16 %v184
    %v283 = vunpack.c.l.b16 %v185
    %v284 = vunpack.c.h.b16 %v185
    %v285 = vunpack.c.l.b16 %v186
    %v286 = vunpack.c.h.b16 %v186
    %v287 = vunpack.c.l.b16 %v187
    %v288 = vunpack.c.h.b16 %v187
    %v289 = vunpack.c.l.b16 %v188
    %v290 = vunpack.c.h.b16 %v188
    %v291 = vunpack.c.l.b16 %v189
    %v292 = vunpack.c.h.b16 %v189
    %v293 = vunpack.c.l.b16 %v190
    %v294 = vunpack.c.h.b16 %v190
    %v295 = vunpack.c.l.b16 %v191
    %v296 = vunpack.c.h.b16 %v191
    %v297 = vunpack.c.l.b16 %v192
    %v298 = vunpack.c.h.b16 %v192
    %v299 = vunpack.c.l.b16 %v193
    %v300 = vunpack.c.h.b16 %v193
    %v301 = vunpack.c.l.b16 %v194
    %v302 = vunpack.c.h.b16 %v194
    %v303 = vpack.c.b16 %v241, %v239
    %v304 = vpack.c.b16 %v242, %v240
    %v305 = vpack.c.b16 %v245, %v243
    %v306 = vpack.c.b16 %v246, %v244
    %v307 = vpack.c.b16 %v249, %v247
    %v308 = vpack.c.b16 %v250, %v248
    %v309 = vpack.c.b16 %v253, %v251
    %v310 = vpack.c.b16 %v254, %v252
    %v311 = vpack.c.b16 %v257, %v255
    %v312 = vpack.c.b16 %v258, %v256
    %v313 = vpack.c.b16 %v261, %v259
    %v314 = vpack.c.b16 %v262, %v260
    %v315 = vpack.c.b16 %v265, %v263
    %v316 = vpack.c.b16 %v266, %v264
    %v317 = vpack.c.b16 %v269, %v267
    %v318 = vpack.c.b16 %v270, %v268
    %v319 = vpack.c.b16 %v273, %v271
    %v320 = vpack.c.b16 %v274, %v272
    %v321 = vpack.c.b16 %v277, %v275
    %v322 = vpack.c.b16 %v278, %v276
    %v323 = vpack.c.b16 %v281, %v279
    %v324 = vpack.c.b16 %v282, %v280
    %v325 = vpack.c.b16 %v285, %v283
    %v326 = vpack.c.b16 %v286, %v284
    %v327 = vpack.c.b16 %v289, %v287
    %v328 = vpack.c.b16 %v290, %v288
    %v329 = vpack.c.b16 %v293, %v291
    %v330 = vpack.c.b16 %v294, %v292
    %v331 = vpack.c.b16 %v297, %v295
    %v332 = vpack.c.b16 %v298, %v296
    %v333 = vpack.c.b16 %v301, %v299
    %v334 = vpack.c.b16 %v302, %v300
    %367 = vmatprep.subr.bf16.mxu0 %v304
    %368 = vmatpush1.bf16.msra.mxu0 %v303
    %369 = vmatprep.subr.bf16.mxu0 %v306
    %370 = vmatpush1.bf16.msra.mxu0 %v305
    %371 = vmatprep.subr.bf16.mxu0 %v308
    %372 = vmatpush1.bf16.msra.mxu0 %v307
    %373 = vmatprep.subr.bf16.mxu0 %v310
    %374 = vmatpush1.bf16.msra.mxu0 %v309
    %375 = vmatprep.subr.bf16.mxu0 %v312
    %376 = vmatpush1.bf16.msra.mxu0 %v311
    %377 = vmatprep.subr.bf16.mxu0 %v314
    %378 = vmatpush1.bf16.msra.mxu0 %v313
    %379 = vmatprep.subr.bf16.mxu0 %v316
    %380 = vmatpush1.bf16.msra.mxu0 %v315
    %381 = vmatprep.subr.bf16.mxu0 %v318
    %382 = vmatpush1.bf16.msra.mxu0 %v317
    %383 = vmatprep.subr.bf16.mxu0 %v320
    %384 = vmatpush1.bf16.msra.mxu0 %v319
    %385 = vmatprep.subr.bf16.mxu0 %v322
    %386 = vmatpush1.bf16.msra.mxu0 %v321
    %387 = vmatprep.subr.bf16.mxu0 %v324
    %388 = vmatpush1.bf16.msra.mxu0 %v323
    %389 = vmatprep.subr.bf16.mxu0 %v326
    %390 = vmatpush1.bf16.msra.mxu0 %v325
    %391 = vmatprep.subr.bf16.mxu0 %v328
    %392 = vmatpush1.bf16.msra.mxu0 %v327
    %393 = vmatprep.subr.bf16.mxu0 %v330
    %394 = vmatpush1.bf16.msra.mxu0 %v329
    %395 = vmatprep.subr.bf16.mxu0 %v332
    %396 = vmatpush1.bf16.msra.mxu0 %v331
    %397 = vmatprep.subr.bf16.mxu0 %v334
    %398 = vmatpush1.bf16.msra.mxu0 %v333
    %399 = vmatprep.mubr.bf16.mxu0 %v162
    %400 = vmatmul.mubr.bf16.gmra.mrb[0].mxu0 %v161
    %v401 = vpop.f32.mrb[0].mxu0
    %v402 = vadd.f32 %v200, %v401
    %v403 = vpop.f32.mrb[0].mxu0
    %v404 = vadd.f32 %v204, %v403
    %v405 = vpop.f32.mrb[0].mxu0
    %v406 = vpop.f32.mrb[0].mxu0
    %407 = vdwg.mxu0
    %v408 = vmax.f32 %v402, 0.0
    %v409 = vmax.f32 %v404, 0.0
    %v410 = vpack.c.bf16 %v408, %v408
    %v411 = vpack.c.bf16 %v409, %v409
    %v412 = vld [vmem:[#allocation8] sm:$0xff]
    %v413 = vld [vmem:[#allocation8 + $0x8] sm:$0xff]
    %v414 = vld [vmem:[#allocation8 + $0x10] sm:$0xff]
    %v415 = vld [vmem:[#allocation8 + $0x18] sm:$0xff]
    %v416 = vld [vmem:[#allocation8 + $0x20] sm:$0xff]
    %v417 = vld [vmem:[#allocation8 + $0x28] sm:$0xff]
    %v418 = vld [vmem:[#allocation8 + $0x30] sm:$0xff]
    %v419 = vld [vmem:[#allocation8 + $0x38] sm:$0xff]
    %v420 = vld [vmem:[#allocation8 + $0x40] sm:$0xff]
    %v421 = vld [vmem:[#allocation8 + $0x48] sm:$0xff]
    %v422 = vld [vmem:[#allocation8 + $0x50] sm:$0xff]
    %v423 = vld [vmem:[#allocation8 + $0x58] sm:$0xff]
    %v424 = vld [vmem:[#allocation8 + $0x60] sm:$0xff]
    %v425 = vld [vmem:[#allocation8 + $0x68] sm:$0xff]
    %v426 = vld [vmem:[#allocation8 + $0x70] sm:$0xff]
    %v427 = vld [vmem:[#allocation8 + $0x78] sm:$0xff]
    %v428 = vld [vmem:[#allocation8 + $0x80] sm:$0xff]
    %v429 = vld [vmem:[#allocation8 + $0x88] sm:$0xff]
    %v430 = vld [vmem:[#allocation8 + $0x90] sm:$0xff]
    %v431 = vld [vmem:[#allocation8 + $0x98] sm:$0xff]
    %v432 = vld [vmem:[#allocation8 + $0xa0] sm:$0xff]
    %v433 = vld [vmem:[#allocation8 + $0xa8] sm:$0xff]
    %v434 = vld [vmem:[#allocation8 + $0xb0] sm:$0xff]
    %v435 = vld [vmem:[#allocation8 + $0xb8] sm:$0xff]
    %v436 = vld [vmem:[#allocation8 + $0xc0] sm:$0xff]
    %v437 = vld [vmem:[#allocation8 + $0xc8] sm:$0xff]
    %v438 = vld [vmem:[#allocation8 + $0xd0] sm:$0xff]
    %v439 = vld [vmem:[#allocation8 + $0xd8] sm:$0xff]
    %v440 = vld [vmem:[#allocation8 + $0xe0] sm:$0xff]
    %v441 = vld [vmem:[#allocation8 + $0xe8] sm:$0xff]
    %v442 = vld [vmem:[#allocation8 + $0xf0] sm:$0xff]
    %v443 = vld [vmem:[#allocation8 + $0xf8] sm:$0xff]
    %v444 = vld [vmem:[%s6] sm:$0x3]
    %v446 = vlaneseq
    %v447 = vshrl.u32 %v446, 7
    %v448 = vsub.s32 0, %v447
    %v449 = vrot.slane %v444, %v448
    %v450 = vlaneseq
    %v451 = vshrl.u32 %v450, 7
    %v452 = vsub.s32 1, %v451
    %v453 = vrot.slane %v444, %v452
    %v488 = vunpack.c.l.b16 %v412
    %v489 = vunpack.c.h.b16 %v412
    %v490 = vunpack.c.l.b16 %v413
    %v491 = vunpack.c.h.b16 %v413
    %v492 = vunpack.c.l.b16 %v414
    %v493 = vunpack.c.h.b16 %v414
    %v494 = vunpack.c.l.b16 %v415
    %v495 = vunpack.c.h.b16 %v415
    %v496 = vunpack.c.l.b16 %v416
    %v497 = vunpack.c.h.b16 %v416
    %v498 = vunpack.c.l.b16 %v417
    %v499 = vunpack.c.h.b16 %v417
    %v500 = vunpack.c.l.b16 %v418
    %v501 = vunpack.c.h.b16 %v418
    %v502 = vunpack.c.l.b16 %v419
    %v503 = vunpack.c.h.b16 %v419
    %v504 = vunpack.c.l.b16 %v420
    %v505 = vunpack.c.h.b16 %v420
    %v506 = vunpack.c.l.b16 %v421
    %v507 = vunpack.c.h.b16 %v421
    %v508 = vunpack.c.l.b16 %v422
    %v509 = vunpack.c.h.b16 %v422
    %v510 = vunpack.c.l.b16 %v423
    %v511 = vunpack.c.h.b16 %v423
    %v512 = vunpack.c.l.b16 %v424
    %v513 = vunpack.c.h.b16 %v424
    %v514 = vunpack.c.l.b16 %v425
    %v515 = vunpack.c.h.b16 %v425
    %v516 = vunpack.c.l.b16 %v426
    %v517 = vunpack.c.h.b16 %v426
    %v518 = vunpack.c.l.b16 %v427
    %v519 = vunpack.c.h.b16 %v427
    %v520 = vunpack.c.l.b16 %v428
    %v521 = vunpack.c.h.b16 %v428
    %v522 = vunpack.c.l.b16 %v429
    %v523 = vunpack.c.h.b16 %v429
    %v524 = vunpack.c.l.b16 %v430
    %v525 = vunpack.c.h.b16 %v430
    %v526 = vunpack.c.l.b16 %v431
    %v527 = vunpack.c.h.b16 %v431
    %v528 = vunpack.c.l.b16 %v432
    %v529 = vunpack.c.h.b16 %v432
    %v530 = vunpack.c.l.b16 %v433
    %v531 = vunpack.c.h.b16 %v433
    %v532 = vunpack.c.l.b16 %v434
    %v533 = vunpack.c.h.b16 %v434
    %v534 = vunpack.c.l.b16 %v435
    %v535 = vunpack.c.h.b16 %v435
    %v536 = vunpack.c.l.b16 %v436
    %v537 = vunpack.c.h.b16 %v436
    %v538 = vunpack.c.l.b16 %v437
    %v539 = vunpack.c.h.b16 %v437
    %v540 = vunpack.c.l.b16 %v438
    %v541 = vunpack.c.h.b16 %v438
    %v542 = vunpack.c.l.b16 %v439
    %v543 = vunpack.c.h.b16 %v439
    %v544 = vunpack.c.l.b16 %v440
    %v545 = vunpack.c.h.b16 %v440
    %v546 = vunpack.c.l.b16 %v441
    %v547 = vunpack.c.h.b16 %v441
    %v548 = vunpack.c.l.b16 %v442
    %v549 = vunpack.c.h.b16 %v442
    %v550 = vunpack.c.l.b16 %v443
    %v551 = vunpack.c.h.b16 %v443
    %v552 = vpack.c.b16 %v490, %v488
    %v553 = vpack.c.b16 %v491, %v489
    %v554 = vpack.c.b16 %v494, %v492
    %v555 = vpack.c.b16 %v495, %v493
    %v556 = vpack.c.b16 %v498, %v496
    %v557 = vpack.c.b16 %v499, %v497
    %v558 = vpack.c.b16 %v502, %v500
    %v559 = vpack.c.b16 %v503, %v501
    %v560 = vpack.c.b16 %v506, %v504
    %v561 = vpack.c.b16 %v507, %v505
    %v562 = vpack.c.b16 %v510, %v508
    %v563 = vpack.c.b16 %v511, %v509
    %v564 = vpack.c.b16 %v514, %v512
    %v565 = vpack.c.b16 %v515, %v513
    %v566 = vpack.c.b16 %v518, %v516
    %v567 = vpack.c.b16 %v519, %v517
    %v568 = vpack.c.b16 %v522, %v520
    %v569 = vpack.c.b16 %v523, %v521
    %v570 = vpack.c.b16 %v526, %v524
    %v571 = vpack.c.b16 %v527, %v525
    %v572 = vpack.c.b16 %v530, %v528
    %v573 = vpack.c.b16 %v531, %v529
    %v574 = vpack.c.b16 %v534, %v532
    %v575 = vpack.c.b16 %v535, %v533
    %v576 = vpack.c.b16 %v538, %v536
    %v577 = vpack.c.b16 %v539, %v537
    %v578 = vpack.c.b16 %v542, %v540
    %v579 = vpack.c.b16 %v543, %v541
    %v580 = vpack.c.b16 %v546, %v544
    %v581 = vpack.c.b16 %v547, %v545
    %v582 = vpack.c.b16 %v550, %v548
    %v583 = vpack.c.b16 %v551, %v549
    %616 = vmatprep.subr.bf16.mxu0 %v553
    %617 = vmatpush1.bf16.msra.mxu0 %v552
    %618 = vmatprep.subr.bf16.mxu0 %v555
    %619 = vmatpush1.bf16.msra.mxu0 %v554
    %620 = vmatprep.subr.bf16.mxu0 %v557
    %621 = vmatpush1.bf16.msra.mxu0 %v556
    %622 = vmatprep.subr.bf16.mxu0 %v559
    %623 = vmatpush1.bf16.msra.mxu0 %v558
    %624 = vmatprep.subr.bf16.mxu0 %v561
    %625 = vmatpush1.bf16.msra.mxu0 %v560
    %626 = vmatprep.subr.bf16.mxu0 %v563
    %627 = vmatpush1.bf16.msra.mxu0 %v562
    %628 = vmatprep.subr.bf16.mxu0 %v565
    %629 = vmatpush1.bf16.msra.mxu0 %v564
    %630 = vmatprep.subr.bf16.mxu0 %v567
    %631 = vmatpush1.bf16.msra.mxu0 %v566
    %632 = vmatprep.subr.bf16.mxu0 %v569
    %633 = vmatpush1.bf16.msra.mxu0 %v568
    %634 = vmatprep.subr.bf16.mxu0 %v571
    %635 = vmatpush1.bf16.msra.mxu0 %v570
    %636 = vmatprep.subr.bf16.mxu0 %v573
    %637 = vmatpush1.bf16.msra.mxu0 %v572
    %638 = vmatprep.subr.bf16.mxu0 %v575
    %639 = vmatpush1.bf16.msra.mxu0 %v574
    %640 = vmatprep.subr.bf16.mxu0 %v577
    %641 = vmatpush1.bf16.msra.mxu0 %v576
    %642 = vmatprep.subr.bf16.mxu0 %v579
    %643 = vmatpush1.bf16.msra.mxu0 %v578
    %644 = vmatprep.subr.bf16.mxu0 %v581
    %645 = vmatpush1.bf16.msra.mxu0 %v580
    %646 = vmatprep.subr.bf16.mxu0 %v583
    %647 = vmatpush1.bf16.msra.mxu0 %v582
    %648 = vmatprep.mubr.bf16.mxu0 %v411
    %649 = vmatmul.mubr.bf16.gmra.mrb[0].mxu0 %v410
    %v650 = vpop.f32.mrb[0].mxu0
    %v651 = vadd.f32 %v449, %v650
    %v652 = vpop.f32.mrb[0].mxu0
    %v653 = vadd.f32 %v453, %v652
    %v654 = vpop.f32.mrb[0].mxu0
    %v655 = vpop.f32.mrb[0].mxu0
    %656 = vdwg.mxu0
    %v657 = vtanh.pop %v653
    %v658 = vadd.f32 %v657, 1.0
    %v659 = vmul.f32 %v658, 11.0
    %v660 = vadd.f32 %v659, -20.0
    %v661 = vmul.f32 %v660, 1.442695
    %v662 = vpow.pop %v661
    %v663 = vld [vmem:[%s7] sm:$0xff]
    %v664 = vmul.f32 %v662, %v663
    %v665 = vadd.f32 %v651, %v664
    %v666 = vlaneseq
    %v667 = vand.u32 %v666, 127
    %vm668 = vcmp.lt.s32.totalorder %v667, 4
    %v669 = vsel %vm668, 1, 0
    %v670 = vcvt.s32.f32 %v669
    %v671 = vmul.f32 %v663, %v663
    %v672 = vmul.f32 %v671, -0.5
    %v673 = vsub.f32 %v672, %v660
    %v674 = vsub.f32 %v673, 0.9189385
    %v675 = vtanh.pop %v651
    %v676 = vtanh.pop %v665
    %v677 = vmul.f32 %v676, %v676
    %v678 = vsub.f32 1.0, %v677
    %v679 = vmax.f32 %v678, 0.0
    %v680 = vmin.f32 %v679, 1.0
    %v681 = vadd.f32 %v680, 1e-06
    %v682 = vlog2.pop %v681
    %v683 = vmul.f32 %v682, 0.6931472
    %v684 = vsub.f32 %v674, %v683
    %v685 = vmul.f32 %v684, %v670
    %686 = vadd.xlane.f32.xlu0 %v685
    %v687 = vpop.xlane.xlu0 %686
    %688 = vst [vmem:[#allocation10] sm:$0xff] %v675
    %689 = vst [vmem:[#allocation11] sm:$0xff] %v676
    %vm690 = vcmask 7168
    %691 = vst.msk [vmem:[%s10] sm:$0xff] %vm690, %v687
    // Predicated region
    $region50: #{tpu_custom_call.1} parent=1 // pred_check
      _
    $region51: #{tpu_custom_call.1} parent=1 // pred_check_branch
      %693 = sbr.rel (0) target = $region53
    $region52: #{tpu_custom_call.1} parent=1 // pred_region
      %s695 = ssub.s32 128, 128
      %696 = vsyncadd [#allocation4], %s695
      %s698 = sshll.u32 [#allocation10], 4
      %s699 = int_to_ptr.vmem [resolvable:$true] %s698
      %701 = dma.vmem_to_hbm [thread:$0]  %s699, 128, %s8, [#allocation4]
    $region53: #{tpu_custom_call.1} parent=1 // pred_fallthru
      _
    // Predicated region
    $region54: #{tpu_custom_call.1} parent=1 // pred_check
      _
    $region55: #{tpu_custom_call.1} parent=1 // pred_check_branch
      %703 = sbr.rel (0) target = $region57
    $region56: #{tpu_custom_call.1} parent=1 // pred_region
      %s705 = ssub.s32 128, 128
      %706 = vsyncadd [#allocation12], %s705
      %s708 = sshll.u32 [#allocation11], 4
      %s709 = int_to_ptr.vmem [resolvable:$true] %s708
      %711 = dma.vmem_to_hbm [thread:$0]  %s709, 128, %s9, [#allocation12]
    $region57: #{tpu_custom_call.1} parent=1 // pred_fallthru
      _
    // Predicated region
    $region58: #{tpu_custom_call.1} parent=1 // pred_check
      _
    $region59: #{tpu_custom_call.1} parent=1 // pred_check_branch
      %713 = sbr.rel (0) target = $region61
    $region60: #{tpu_custom_call.1} parent=1 // pred_region
      _
    $region61: #{tpu_custom_call.1} parent=1 // pred_fallthru
      _
    // Predicated region
    $region62: #{tpu_custom_call.1} parent=1 // pred_check
      _
    $region63: #{tpu_custom_call.1} parent=1 // pred_check_branch
      %715 = sbr.rel (0) target = $region65
    $region64: #{tpu_custom_call.1} parent=1 // pred_region
      %716 = dma.done [#allocation4], 128
    $region65: #{tpu_custom_call.1} parent=1 // pred_fallthru
      _
    // Predicated region
    $region66: #{tpu_custom_call.1} parent=1 // pred_check
      _
    $region67: #{tpu_custom_call.1} parent=1 // pred_check_branch
      %718 = sbr.rel (0) target = $region69
    $region68: #{tpu_custom_call.1} parent=1 // pred_region
      %719 = dma.done [#allocation12], 128
    $region69: #{tpu_custom_call.1} parent=1 // pred_fallthru
      _
    // Predicated region
    $region70: #{tpu_custom_call.1} parent=1 // pred_check
      _
    $region71: #{tpu_custom_call.1} parent=1 // pred_check_branch
      %721 = sbr.rel (0) target = $region73
    $region72: #{tpu_custom_call.1} parent=1 // pred_region
      _
    $region73: #{tpu_custom_call.1} parent=1 // pred_fallthru
      _
    %722 = vsyncpa [#allocation3], 1
    %723 = vsyncpa [#allocation6], 1
    %724 = vsyncpa [#allocation9], 1
    %725 = vsyncpa [#allocation4], 1
    %726 = vsyncpa [#allocation12], 1

</llo_original>
